<compile_context>
chip_gen: v5e
topology: v5e:2x2
jax: 0.10.0
libtpu: 0.0.40
codegen_flags: <defaults>
</compile_context>

<pallas_src>
import jax
import jax.numpy as jnp
from jax.experimental import pallas as pl
from jax.experimental.pallas import tpu as pltpu

BATCH_SIZE = 5
HIDDEN_SIZE = 2
INPUT_SIZE = 4


def lstm_cell_kernel(x_ref, wih_t_ref, out_ref):
    x = x_ref[...].astype(jnp.float32)        # (B, I)
    w = wih_t_ref[...].astype(jnp.float32)    # (I, 4H), pre-packed in wrapper

    _, I = x.shape
    four_h = w.shape[1]
    H = four_h // 4

    # Gates via I broadcast FMAs on the VPU; skips the MXU entirely (the
    # (5,4)x(4,8) matmul would pay full push/pop latency for <1% utilization).
    gates = x[:, 0:1] * w[0:1, :]             # (B,1)*(1,4H) -> (B,4H)
    for k in range(1, I):                     # static unroll, I == 4
        gates = gates + x[:, k:k + 1] * w[k:k + 1, :]

    # Two full-vreg EUP passes; slice the lanes we need afterwards.
    sig = jax.nn.sigmoid(gates)
    tnh = jnp.tanh(gates)

    # torch.split(weight_ih, H, dim=0) ordering -> columns [i | f | g | o].
    input_gate = sig[:, 0:H]
    # forget gate is dead code: c_prev == 0 so forget_gate * c_prev == 0.
    cell_gate = tnh[:, 2 * H:3 * H]
    output_gate = sig[:, 3 * H:4 * H]

    cell = input_gate * cell_gate             # == forget*0 + input*cell
    hidden = output_gate * jnp.tanh(cell)

    # Single (B, 2H) output slab written with two direct sliced stores
    # (no in-kernel concatenate -> no XLU shuffles on the critical path).
    out_ref[:, 0:H] = hidden.astype(out_ref.dtype)
    out_ref[:, H:2 * H] = cell.astype(out_ref.dtype)


def pack_weight_ih(weight_ih):
    """One-time weight packing: (4H, I) -> (I, 4H), natural MXU/VPU orientation.

    Call once at parameter-init time so no per-step transpose HLO is emitted.
    """
    return jnp.asarray(weight_ih, jnp.float32).T


def lstm_cell_packed(x, wih_packed):
    """Forward on a pre-packed weight. Matches LSTMCell.forward(x) (h0=c0=0)."""
    B, _ = x.shape
    four_h = wih_packed.shape[1]
    assert four_h % 4 == 0
    H = four_h // 4

    vmem = pl.BlockSpec(memory_space=pltpu.MemorySpace.VMEM)
    out = pl.pallas_call(
        lstm_cell_kernel,
        out_shape=jax.ShapeDtypeStruct((B, 2 * H), jnp.float32),
        in_specs=[vmem, vmem],
        out_specs=vmem,
    )(x, wih_packed)

    return out[:, :H], out[:, H:]


def lstm_cell(x, weight_ih, weight_hh=None):
    """Parameter-parity wrapper.

    weight_hh is accepted only for parity with the PyTorch module; it is never
    used because the module's forward zeros h_prev/c_prev, making every
    weight_hh contribution exactly zero.  (Do NOT reuse this for nonzero
    recurrent state -- see TODO at top.)
    """
    del weight_hh
    return lstm_cell_packed(x, pack_weight_ih(weight_ih))


def lstm_cell_ref(x, weight_ih, weight_hh):
    # Pure-JAX reference mirroring the PyTorch forward exactly.
    B = x.shape[0]
    H = weight_hh.shape[1]
    h_prev = jnp.zeros((B, H), jnp.float32)
    c_prev = jnp.zeros((B, H), jnp.float32)
    w_ii, w_if, w_ig, w_io = jnp.split(weight_ih, 4, axis=0)
    w_hi, w_hf, w_hg, w_ho = jnp.split(weight_hh, 4, axis=0)
    ig = jax.nn.sigmoid(x @ w_ii.T + h_prev @ w_hi.T)
    fg = jax.nn.sigmoid(x @ w_if.T + h_prev @ w_hf.T)
    cg = jnp.tanh(x @ w_ig.T + h_prev @ w_hg.T)
    og = jax.nn.sigmoid(x @ w_io.T + h_prev @ w_ho.T)
    cell = fg * c_prev + ig * cg
    hidden = og * jnp.tanh(cell)
    return hidden, cell


if __name__ == "__main__":
    key = jax.random.PRNGKey(0)
    kx, kih, khh = jax.random.split(key, 3)

    # Deterministic synthetic parameters (the module's __init__ only gives shapes;
    # note torch.nn.LSTMCell-style biases are NOT part of this module's forward).
    x = jax.random.normal(kx, (BATCH_SIZE, INPUT_SIZE), dtype=jnp.float32)
    weight_ih = jax.random.normal(kih, (4 * HIDDEN_SIZE, INPUT_SIZE), dtype=jnp.float32)
    weight_hh = jax.random.normal(khh, (4 * HIDDEN_SIZE, HIDDEN_SIZE), dtype=jnp.float32)

    # Weight is packed once ("init" time); the per-step path is jitted so the
    # tiny output split fuses and is compiled exactly once.
    wih_packed = pack_weight_ih(weight_ih)
    fwd = jax.jit(lstm_cell_packed)

    hidden, cell = fwd(x, wih_packed)
    jax.block_until_ready((hidden, cell))

    h_ref, c_ref = lstm_cell_ref(x, weight_ih, weight_hh)
    assert jnp.allclose(hidden, h_ref, atol=1e-5, rtol=1e-5)
    assert jnp.allclose(cell, c_ref, atol=1e-5, rtol=1e-5)

    print("KERNEL_OK")
</pallas_src>

<mosaic_0001>
module attributes {stable_mosaic.version = 11 : i64} {
  func.func @lstm_cell_kernel(%arg0: memref<5x4xf32, #tpu.memory_space<vmem>>, %arg1: memref<4x8xf32, #tpu.memory_space<vmem>>, %arg2: memref<5x4xf32, #tpu.memory_space<vmem>>) attributes {dimension_semantics = [], scalar_prefetch = 0 : i64, scratch_operands = 0 : i64, tpu.core_type = #tpu.core_type<tc>} {
    %c0 = arith.constant 0 : index
    %c0_0 = arith.constant 0 : index
    %0 = vector.load %arg0[%c0, %c0_0] : memref<5x4xf32, #tpu.memory_space<vmem>>, vector<5x4xf32>
    %c0_1 = arith.constant 0 : index
    %c0_2 = arith.constant 0 : index
    %1 = vector.load %arg1[%c0_1, %c0_2] : memref<4x8xf32, #tpu.memory_space<vmem>>, vector<4x8xf32>
    %2 = vector.extract_strided_slice %0 {offsets = [0, 0], sizes = [5, 1], strides = [1, 1]} : vector<5x4xf32> to vector<5x1xf32>
    %3 = vector.extract_strided_slice %1 {offsets = [0, 0], sizes = [1, 8], strides = [1, 1]} : vector<4x8xf32> to vector<1x8xf32>
    %4 = vector.broadcast %2 : vector<5x1xf32> to vector<5x8xf32>
    %5 = vector.broadcast %3 : vector<1x8xf32> to vector<5x8xf32>
    %6 = arith.mulf %4, %5 : vector<5x8xf32>
    %7 = vector.extract_strided_slice %0 {offsets = [0, 1], sizes = [5, 1], strides = [1, 1]} : vector<5x4xf32> to vector<5x1xf32>
    %8 = vector.extract_strided_slice %1 {offsets = [1, 0], sizes = [1, 8], strides = [1, 1]} : vector<4x8xf32> to vector<1x8xf32>
    %9 = vector.broadcast %7 : vector<5x1xf32> to vector<5x8xf32>
    %10 = vector.broadcast %8 : vector<1x8xf32> to vector<5x8xf32>
    %11 = arith.mulf %9, %10 : vector<5x8xf32>
    %12 = arith.addf %6, %11 : vector<5x8xf32>
    %13 = vector.extract_strided_slice %0 {offsets = [0, 2], sizes = [5, 1], strides = [1, 1]} : vector<5x4xf32> to vector<5x1xf32>
    %14 = vector.extract_strided_slice %1 {offsets = [2, 0], sizes = [1, 8], strides = [1, 1]} : vector<4x8xf32> to vector<1x8xf32>
    %15 = vector.broadcast %13 : vector<5x1xf32> to vector<5x8xf32>
    %16 = vector.broadcast %14 : vector<1x8xf32> to vector<5x8xf32>
    %17 = arith.mulf %15, %16 : vector<5x8xf32>
    %18 = arith.addf %12, %17 : vector<5x8xf32>
    %19 = vector.extract_strided_slice %0 {offsets = [0, 3], sizes = [5, 1], strides = [1, 1]} : vector<5x4xf32> to vector<5x1xf32>
    %20 = vector.extract_strided_slice %1 {offsets = [3, 0], sizes = [1, 8], strides = [1, 1]} : vector<4x8xf32> to vector<1x8xf32>
    %21 = vector.broadcast %19 : vector<5x1xf32> to vector<5x8xf32>
    %22 = vector.broadcast %20 : vector<1x8xf32> to vector<5x8xf32>
    %23 = arith.mulf %21, %22 : vector<5x8xf32>
    %24 = arith.addf %18, %23 : vector<5x8xf32>
    %25 = arith.negf %24 : vector<5x8xf32>
    %26 = math.exp %25 : vector<5x8xf32>
    %cst = arith.constant 1.000000e+00 : f32
    %27 = vector.broadcast %cst : f32 to vector<5x8xf32>
    %28 = arith.addf %27, %26 : vector<5x8xf32>
    %29 = arith.divf %27, %28 : vector<5x8xf32>
    %30 = math.tanh %24 : vector<5x8xf32>
    %31 = vector.extract_strided_slice %29 {offsets = [0, 0], sizes = [5, 2], strides = [1, 1]} : vector<5x8xf32> to vector<5x2xf32>
    %32 = vector.extract_strided_slice %30 {offsets = [0, 4], sizes = [5, 2], strides = [1, 1]} : vector<5x8xf32> to vector<5x2xf32>
    %33 = vector.extract_strided_slice %29 {offsets = [0, 6], sizes = [5, 2], strides = [1, 1]} : vector<5x8xf32> to vector<5x2xf32>
    %34 = arith.mulf %31, %32 : vector<5x2xf32>
    %35 = math.tanh %34 : vector<5x2xf32>
    %36 = arith.mulf %33, %35 : vector<5x2xf32>
    %c0_3 = arith.constant 0 : index
    %c0_4 = arith.constant 0 : index
    %37 = vector.load %arg2[%c0_3, %c0_4] : memref<5x4xf32, #tpu.memory_space<vmem>>, vector<5x2xf32>
    tpu.vector_store %arg2[%c0_3, %c0_4], %36 {strides = array<i32>} : memref<5x4xf32, #tpu.memory_space<vmem>>, vector<5x2xf32>,
    %c0_5 = arith.constant 0 : index
    %c2 = arith.constant 2 : index
    %38 = vector.load %arg2[%c0_5, %c2] : memref<5x4xf32, #tpu.memory_space<vmem>>, vector<5x2xf32>
    tpu.vector_store %arg2[%c0_5, %c2], %34 {strides = array<i32>} : memref<5x4xf32, #tpu.memory_space<vmem>>, vector<5x2xf32>,
    return
  }
}

</mosaic_0001>

<llo_original>
// kernel: lstm_cell_packed.1
$region0: #{lstm_cell_packed.1}
  #allocation0 [shape = 'u32[]', space=smem, size = 0x4, offset = 0x4, fixed_abs, tag = 'smem constant byte address 0x4 - core index']
  #allocation1 [shape = 'u32[72,128]{1,0:T(1,128)}', space=vmem, size = 0x9000, scoped, tag = 'internal scratch']
  %s0 = inlined_call_operand.vmem [shape: f32[5,4], index: 0, kind: input, shape index: {}]
  %s1 = inlined_call_operand.vmem [shape: f32[4,8], index: 1, kind: input, shape index: {}]
  %s2 = inlined_call_operand.vmem [shape: f32[5,4], index: 2, kind: output, shape index: {}]
  %s3 = sld [smem:[#allocation0]]
  $region18: #{lstm_cell_packed.1} parent=0
    _
  %s5 = ssub.s32 1, %s3
  %s6 = scalar_select 0, %s5, %s3
  // Predicated region
  $region2: #{lstm_cell_packed.1} parent=0 // pred_check
    _
  $region3: #{lstm_cell_packed.1} parent=0 // pred_check_branch
    %8 = sbr.rel (0) target = $region5
  $region4: #{lstm_cell_packed.1} parent=0 // pred_region
    _
  $region5: #{lstm_cell_packed.1} parent=0 // pred_fallthru
    _
  // Predicated region
  $region6: #{lstm_cell_packed.1} parent=0 // pred_check
    _
  $region7: #{lstm_cell_packed.1} parent=0 // pred_check_branch
    %10 = sbr.rel (0) target = $region9
  $region8: #{lstm_cell_packed.1} parent=0 // pred_region
    _
  $region9: #{lstm_cell_packed.1} parent=0 // pred_fallthru
    _
  %v11 = vld [vmem:[%s0] sm:$0x1f]
  %v12 = vld [vmem:[%s1] sm:$0xf]
  %14 = vset.pattern.permute.xlu0 0
  %15 = vperm.xlu0 %14, %v11
  %v16 = vpop.permute.xlu0 %15
  %v18 = vperm.slane %v12, 0
  %v19 = vmul.f32 %v16, %v18
  %20 = vset.pattern.permute.xlu0 1
  %21 = vperm.xlu0 %20, %v11
  %v22 = vpop.permute.xlu0 %21
  %v24 = vperm.slane %v12, 1
  %v25 = vmul.f32 %v22, %v24
  %v26 = vadd.f32 %v19, %v25
  %27 = vset.pattern.permute.xlu0 2
  %28 = vperm.xlu0 %27, %v11
  %v29 = vpop.permute.xlu0 %28
  %v31 = vperm.slane %v12, 2
  %v32 = vmul.f32 %v29, %v31
  %v33 = vadd.f32 %v26, %v32
  %34 = vset.pattern.permute.xlu0 3
  %35 = vperm.xlu0 %34, %v11
  %v36 = vpop.permute.xlu0 %35
  %v38 = vperm.slane %v12, 3
  %v39 = vmul.f32 %v36, %v38
  %v40 = vadd.f32 %v33, %v39
  %v41 = vxor.u32 %v40, 2147483648
  %v42 = vmul.f32 %v41, 1.442695
  %v43 = vpow.pop %v42
  %v44 = vadd.f32 %v43, 1.0
  %v45 = vrcp.pop %v44
  %v46 = vmul.f32 %v44, %v45
  %v47 = vsub.f32 1.0, %v46
  %v48 = vmul.f32 %v45, %v47
  %v49 = vadd.f32 %v45, %v48
  %vm50 = vweird.f32 %v44
  %vm51 = vweird.f32 %v45
  %vm52 = vmor %vm50, %vm51
  %v53 = vsel %vm52, %v45, %v49
  %v54 = vand.u32 2147483647, %v44
  %vm55 = vcmp.eq.f32.partialorder %v54, 8.507059e+37
  %v56 = vand.u32 %v44, 2147483648
  %v57 = vor.u32 1.1754944e-38, %v56
  %v58 = vsel %vm55, %v57, %v53
  %v59 = vmul.f32 1.0, %v58
  %v60 = vtanh.pop %v40
  %62 = vrot.lane.b32.xlu0 %v60, 124
  %v63 = vpop.permute.xlu0 %62
  %v65 = vmul.f32 %v59, %v63
  %v66 = vtanh.pop %v65
  %68 = vrot.lane.b32.xlu0 %v66, 6
  %v69 = vpop.permute.xlu0 %68
  %v71 = vmul.f32 %v59, %v69
  %73 = vrot.lane.b32.xlu0 %v71, 122
  %v74 = vpop.permute.xlu0 %73
  %vm76 = vcmask 12288
  %77 = vst.msk [vmem:[%s2] sm:$0x1f] %vm76, %v74
  %79 = vrot.lane.b32.xlu0 %v65, 2
  %v80 = vpop.permute.xlu0 %79
  %vm82 = vcmask 28688
  %83 = vst.msk [vmem:[%s2] sm:$0x1f] %vm82, %v80
  // Predicated region
  $region10: #{lstm_cell_packed.1} parent=0 // pred_check
    _
  $region11: #{lstm_cell_packed.1} parent=0 // pred_check_branch
    %85 = sbr.rel (0) target = $region13
  $region12: #{lstm_cell_packed.1} parent=0 // pred_region
    _
  $region13: #{lstm_cell_packed.1} parent=0 // pred_fallthru
    _
  // Predicated region
  $region14: #{lstm_cell_packed.1} parent=0 // pred_check
    _
  $region15: #{lstm_cell_packed.1} parent=0 // pred_check_branch
    %87 = sbr.rel (0) target = $region17
  $region16: #{lstm_cell_packed.1} parent=0 // pred_region
    _
  $region17: #{lstm_cell_packed.1} parent=0 // pred_fallthru
    _

</llo_original>
